<compile_context>
chip_gen: v5e
topology: v5e:2x2
jax: 0.10.0
libtpu: 0.0.40
codegen_flags: <defaults>
</compile_context>

<pallas_src>
import math
from functools import partial

import jax
import jax.numpy as jnp
import numpy as np
from jax import lax
from jax.experimental import pallas as pl
from jax.experimental.pallas import tpu as pltpu

# ----- small config (consistent with GPTConfig semantics, scaled down) -----
B = 2            # batch
T = 8            # sequence length
N_HEAD = 4       # heads
HEAD_DIM = 32    # head dim
C = N_HEAD * HEAD_DIM  # n_embd = 128  -> lane-dense (last dim = 128) outputs


# --------------------------- fused Pallas kernel ----------------------------
def _fused_csa_kernel(x_ref, w_attn_ref, b_attn_ref, w_proj_ref, b_proj_ref,
                      o_ref, *, n_head: int):
    # x_ref / o_ref: (T, C) for one batch element (leading batch dim squeezed).
    # w_attn_ref: (C, 3C), b_attn_ref: (1, 3C), w_proj_ref: (C, C), b_proj_ref: (1, C)
    t, c = x_ref.shape
    d = c // n_head
    scale = 1.0 / math.sqrt(d)

    # --- c_attn: one MXU matmul produces q|k|v ------------------------------
    x = x_ref[...]
    qkv = (jnp.dot(x, w_attn_ref[...], preferred_element_type=jnp.float32)
           + b_attn_ref[...])                                   # (T, 3C) f32

    # --- causal mask generated in-kernel (no HBM mask DMA), hoisted ---------
    row = lax.broadcasted_iota(jnp.int32, (t, t), 0)
    col = lax.broadcasted_iota(jnp.int32, (t, t), 1)
    causal = row >= col                                          # (T, T) bool

    # --- per-head attention with c_proj folded into the head loop -----------
    # y @ W_proj == sum_h (y_h @ W_proj[h*D:(h+1)*D, :]), so the head merge
    # (transpose + reshape) never materializes.  Accumulator starts at the
    # broadcast c_proj bias so there is no separate epilogue add.
    acc = jnp.broadcast_to(b_proj_ref[...], (t, c)).astype(jnp.float32)
    for h in range(n_head):
        qh = qkv[:, h * d:(h + 1) * d] * scale                  # pre-scale q
        kh = qkv[:, c + h * d:c + (h + 1) * d]
        vh = qkv[:, 2 * c + h * d:2 * c + (h + 1) * d]

        # Q @ K^T via contraction of the last dims (no materialized transpose).
        s = lax.dot_general(qh, kh, (((1,), (1,)), ((), ())),
                            preferred_element_type=jnp.float32)  # (T, T)
        s = jnp.where(causal, s, -1e30)       # finite fill: no NaN if row fully masked
        s = s - jnp.max(s, axis=-1, keepdims=True)
        p = jnp.exp(s)
        denom = jnp.sum(p, axis=-1, keepdims=True)
        p = p * pl.reciprocal(denom, approx=True)                # divide -> EUP slot

        yh = jnp.dot(p, vh, preferred_element_type=jnp.float32)  # (T, D)
        acc = acc + jnp.dot(yh, w_proj_ref[h * d:(h + 1) * d, :],
                            preferred_element_type=jnp.float32)  # (T, C)

    # Single lane-dense (T, C) store; astype is the one downcast point if the
    # output dtype ever moves to bf16 (no-op for f32).
    o_ref[...] = acc.astype(o_ref.dtype)


# --------------------------- wrapper ----------------------------------------
def causal_self_attention(x, input_pos, mask, w_attn, b_attn, w_proj, b_proj,
                          *, n_head=N_HEAD):
    """Forward pass of CausalSelfAttention (kv_cache=None, dropout=0).

    input_pos is unused (only relevant when kv_cache is not None). The module is
    causal, so the mask is regenerated in-kernel via iota instead of being DMA'd.
    """
    del input_pos, mask
    b, t, c = x.shape
    kern = partial(_fused_csa_kernel, n_head=n_head)
    return pl.pallas_call(
        kern,
        out_shape=jax.ShapeDtypeStruct((b, t, c), x.dtype),
        grid=(b,),
        in_specs=[
            pl.BlockSpec((None, t, c), lambda i: (i, 0, 0)),   # x: one batch element
            pl.BlockSpec((c, 3 * c), lambda i: (0, 0)),        # w_attn (resident)
            pl.BlockSpec((1, 3 * c), lambda i: (0, 0)),        # b_attn
            pl.BlockSpec((c, c), lambda i: (0, 0)),            # w_proj
            pl.BlockSpec((1, c), lambda i: (0, 0)),            # b_proj
        ],
        out_specs=pl.BlockSpec((None, t, c), lambda i: (i, 0, 0)),
        compiler_params=pltpu.CompilerParams(
            # Batch axis is independent -> shards across the 2 TensorCores on v7x.
            dimension_semantics=("parallel",),
        ),
    )(x, w_attn, b_attn.reshape(1, -1), w_proj, b_proj.reshape(1, -1))


# --------------------------- reference (plain JAX) ---------------------------
def _reference(x, mask_bool, w_attn, b_attn, w_proj, b_proj, n_head=N_HEAD):
    b, t, c = x.shape
    d = c // n_head
    qkv = x.reshape(b * t, c) @ w_attn + b_attn
    qkv = qkv.reshape(b, t, 3 * c)
    q, k, v = jnp.split(qkv, 3, axis=2)
    sh = lambda z: z.reshape(b, t, n_head, d).transpose(0, 2, 1, 3)
    q, k, v = sh(q), sh(k), sh(v)
    s = jnp.einsum("bhqd,bhkd->bhqk", q, k) / math.sqrt(d)
    s = jnp.where(mask_bool, s, -1e30)
    p = jax.nn.softmax(s, axis=-1)
    y = jnp.einsum("bhqk,bhkd->bhqd", p, v)
    y = y.transpose(0, 2, 1, 3).reshape(b, t, c)
    return (y.reshape(b * t, c) @ w_proj + b_proj).reshape(b, t, c)


# --------------------------- main --------------------------------------------
if __name__ == "__main__":
    key = jax.random.PRNGKey(0)
    kx, k1, k2, k3, k4 = jax.random.split(key, 5)

    # Parameters stored pre-transposed (in, out) so kernels do x @ W + b.
    w_attn = 0.02 * jax.random.normal(k1, (C, 3 * C), jnp.float32)
    b_attn = 0.02 * jax.random.normal(k2, (3 * C,), jnp.float32)
    w_proj = 0.02 * jax.random.normal(k3, (C, C), jnp.float32)
    b_proj = 0.02 * jax.random.normal(k4, (C,), jnp.float32)

    x = jax.random.normal(kx, (B, T, C), jnp.float32)
    input_pos = jnp.arange(T, dtype=jnp.int32)  # unused (kv_cache is None)

    # Causal mask (True = attend) — used only by the reference; kernel builds it.
    mask_bool = jnp.tril(jnp.ones((T, T), dtype=bool))[None, None, :, :]

    out = causal_self_attention(x, input_pos, mask_bool,
                                w_attn, b_attn, w_proj, b_proj)
    out = jax.block_until_ready(out)

    ref = _reference(x, mask_bool, w_attn, b_attn, w_proj, b_proj)
    np.testing.assert_allclose(np.asarray(out), np.asarray(ref),
                               atol=1e-3, rtol=1e-3)

    print("KERNEL_OK")
</pallas_src>

<mosaic_0001>
module attributes {stable_mosaic.version = 11 : i64} {
  func.func @_fused_csa_kernel(%arg0: i32, %arg1: memref<1x8x128xf32, #tpu.memory_space<vmem>>, %arg2: memref<128x384xf32, #tpu.memory_space<vmem>>, %arg3: memref<1x384xf32, #tpu.memory_space<vmem>>, %arg4: memref<128x128xf32, #tpu.memory_space<vmem>>, %arg5: memref<1x128xf32, #tpu.memory_space<vmem>>, %arg6: memref<1x8x128xf32, #tpu.memory_space<vmem>>) attributes {dimension_semantics = [#tpu.dimension_semantics<parallel>], iteration_bounds = array<i64: 2>, scalar_prefetch = 0 : i64, scratch_operands = 0 : i64, tpu.core_type = #tpu.core_type<tc>, window_params = [{transform_indices = @transform_0, window_bounds = array<i64: 1, 8, 128>}, {pipeline_mode = #tpu.pipeline_mode<synchronous>, transform_indices = @transform_1, window_bounds = array<i64: 128, 384>}, {pipeline_mode = #tpu.pipeline_mode<synchronous>, transform_indices = @transform_2, window_bounds = array<i64: 1, 384>}, {pipeline_mode = #tpu.pipeline_mode<synchronous>, transform_indices = @transform_3, window_bounds = array<i64: 128, 128>}, {pipeline_mode = #tpu.pipeline_mode<synchronous>, transform_indices = @transform_4, window_bounds = array<i64: 1, 128>}, {transform_indices = @transform_5, window_bounds = array<i64: 1, 8, 128>}]} {
    %c0 = arith.constant 0 : index
    %c0_0 = arith.constant 0 : index
    %c0_1 = arith.constant 0 : index
    %0 = vector.load %arg1[%c0, %c0_0, %c0_1] : memref<1x8x128xf32, #tpu.memory_space<vmem>>, vector<1x8x128xf32>
    %1 = vector.shape_cast %0 : vector<1x8x128xf32> to vector<8x128xf32>
    %c0_2 = arith.constant 0 : index
    %c0_3 = arith.constant 0 : index
    %2 = vector.load %arg2[%c0_2, %c0_3] : memref<128x384xf32, #tpu.memory_space<vmem>>, vector<128x384xf32>
    %cst = arith.constant dense<0.000000e+00> : vector<8x384xf32>
    %3 = tpu.matmul %1, %2, %cst {dimension_numbers = #tpu.dot_dimension_numbers<[1], [0], [0], [1], [0, 0, 1, 1], [], []>} : vector<8x128xf32>, vector<128x384xf32>, vector<8x384xf32> -> vector<8x384xf32>
    %c0_4 = arith.constant 0 : index
    %c0_5 = arith.constant 0 : index
    %4 = vector.load %arg3[%c0_4, %c0_5] : memref<1x384xf32, #tpu.memory_space<vmem>>, vector<1x384xf32>
    %5 = vector.broadcast %4 : vector<1x384xf32> to vector<8x384xf32>
    %6 = arith.addf %3, %5 : vector<8x384xf32>
    %7 = tpu.iota {dimensions = array<i32: 0>} : vector<8x8xi32>
    %8 = tpu.iota {dimensions = array<i32: 1>} : vector<8x8xi32>
    %9 = arith.cmpi sge, %7, %8 : vector<8x8xi32>
    %c0_6 = arith.constant 0 : index
    %c0_7 = arith.constant 0 : index
    %10 = vector.load %arg5[%c0_6, %c0_7] : memref<1x128xf32, #tpu.memory_space<vmem>>, vector<1x128xf32>
    %11 = vector.shape_cast %10 : vector<1x128xf32> to vector<1x128xf32>
    %12 = vector.broadcast %11 : vector<1x128xf32> to vector<8x128xf32>
    %13 = vector.extract_strided_slice %6 {offsets = [0, 0], sizes = [8, 32], strides = [1, 1]} : vector<8x384xf32> to vector<8x32xf32>
    %cst_8 = arith.constant 0.176776692 : f32
    %14 = vector.broadcast %cst_8 : f32 to vector<8x32xf32>
    %15 = arith.mulf %13, %14 : vector<8x32xf32>
    %16 = vector.extract_strided_slice %6 {offsets = [0, 128], sizes = [8, 32], strides = [1, 1]} : vector<8x384xf32> to vector<8x32xf32>
    %17 = vector.extract_strided_slice %6 {offsets = [0, 256], sizes = [8, 32], strides = [1, 1]} : vector<8x384xf32> to vector<8x32xf32>
    %cst_9 = arith.constant dense<0.000000e+00> : vector<8x8xf32>
    %18 = tpu.matmul %15, %16, %cst_9 {dimension_numbers = #tpu.dot_dimension_numbers<[1], [1], [0], [0], [0, 0, 1, 0], [], []>} : vector<8x32xf32>, vector<8x32xf32>, vector<8x8xf32> -> vector<8x8xf32>
    %cst_10 = arith.constant -1.000000e+30 : f32
    %19 = vector.broadcast %cst_10 : f32 to vector<8x8xf32>
    %20 = arith.select %9, %18, %19 : vector<8x8xi1>, vector<8x8xf32>
    %cst_11 = arith.constant dense<0xFF800000> : vector<8xf32>
    %21 = vector.multi_reduction <maximumf>, %20, %cst_11 [1] : vector<8x8xf32> to vector<8xf32>
    %22 = vector.shape_cast %21 : vector<8xf32> to vector<8x1xf32>
    %23 = vector.broadcast %22 : vector<8x1xf32> to vector<8x8xf32>
    %24 = arith.subf %20, %23 : vector<8x8xf32>
    %25 = math.exp %24 : vector<8x8xf32>
    %cst_12 = arith.constant dense<0.000000e+00> : vector<8xf32>
    %26 = vector.multi_reduction <add>, %25, %cst_12 [1] : vector<8x8xf32> to vector<8xf32>
    %27 = vector.shape_cast %26 : vector<8xf32> to vector<8x1xf32>
    %28 = tpu.reciprocal %27 {approx = true} : vector<8x1xf32> -> vector<8x1xf32>
    %29 = vector.broadcast %28 : vector<8x1xf32> to vector<8x8xf32>
    %30 = arith.mulf %25, %29 : vector<8x8xf32>
    %cst_13 = arith.constant dense<0.000000e+00> : vector<8x32xf32>
    %31 = tpu.matmul %30, %17, %cst_13 {dimension_numbers = #tpu.dot_dimension_numbers<[1], [0], [0], [1], [0, 0, 1, 1], [], []>} : vector<8x8xf32>, vector<8x32xf32>, vector<8x32xf32> -> vector<8x32xf32>
    %c0_14 = arith.constant 0 : index
    %c0_15 = arith.constant 0 : index
    %32 = vector.load %arg4[%c0_14, %c0_15] : memref<128x128xf32, #tpu.memory_space<vmem>>, vector<32x128xf32>
    %cst_16 = arith.constant dense<0.000000e+00> : vector<8x128xf32>
    %33 = tpu.matmul %31, %32, %cst_16 {dimension_numbers = #tpu.dot_dimension_numbers<[1], [0], [0], [1], [0, 0, 1, 1], [], []>} : vector<8x32xf32>, vector<32x128xf32>, vector<8x128xf32> -> vector<8x128xf32>
    %34 = arith.addf %12, %33 : vector<8x128xf32>
    %35 = vector.extract_strided_slice %6 {offsets = [0, 32], sizes = [8, 32], strides = [1, 1]} : vector<8x384xf32> to vector<8x32xf32>
    %cst_17 = arith.constant 0.176776692 : f32
    %36 = vector.broadcast %cst_17 : f32 to vector<8x32xf32>
    %37 = arith.mulf %35, %36 : vector<8x32xf32>
    %38 = vector.extract_strided_slice %6 {offsets = [0, 160], sizes = [8, 32], strides = [1, 1]} : vector<8x384xf32> to vector<8x32xf32>
    %39 = vector.extract_strided_slice %6 {offsets = [0, 288], sizes = [8, 32], strides = [1, 1]} : vector<8x384xf32> to vector<8x32xf32>
    %cst_18 = arith.constant dense<0.000000e+00> : vector<8x8xf32>
    %40 = tpu.matmul %37, %38, %cst_18 {dimension_numbers = #tpu.dot_dimension_numbers<[1], [1], [0], [0], [0, 0, 1, 0], [], []>} : vector<8x32xf32>, vector<8x32xf32>, vector<8x8xf32> -> vector<8x8xf32>
    %cst_19 = arith.constant -1.000000e+30 : f32
    %41 = vector.broadcast %cst_19 : f32 to vector<8x8xf32>
    %42 = arith.select %9, %40, %41 : vector<8x8xi1>, vector<8x8xf32>
    %cst_20 = arith.constant dense<0xFF800000> : vector<8xf32>
    %43 = vector.multi_reduction <maximumf>, %42, %cst_20 [1] : vector<8x8xf32> to vector<8xf32>
    %44 = vector.shape_cast %43 : vector<8xf32> to vector<8x1xf32>
    %45 = vector.broadcast %44 : vector<8x1xf32> to vector<8x8xf32>
    %46 = arith.subf %42, %45 : vector<8x8xf32>
    %47 = math.exp %46 : vector<8x8xf32>
    %cst_21 = arith.constant dense<0.000000e+00> : vector<8xf32>
    %48 = vector.multi_reduction <add>, %47, %cst_21 [1] : vector<8x8xf32> to vector<8xf32>
    %49 = vector.shape_cast %48 : vector<8xf32> to vector<8x1xf32>
    %50 = tpu.reciprocal %49 {approx = true} : vector<8x1xf32> -> vector<8x1xf32>
    %51 = vector.broadcast %50 : vector<8x1xf32> to vector<8x8xf32>
    %52 = arith.mulf %47, %51 : vector<8x8xf32>
    %cst_22 = arith.constant dense<0.000000e+00> : vector<8x32xf32>
    %53 = tpu.matmul %52, %39, %cst_22 {dimension_numbers = #tpu.dot_dimension_numbers<[1], [0], [0], [1], [0, 0, 1, 1], [], []>} : vector<8x8xf32>, vector<8x32xf32>, vector<8x32xf32> -> vector<8x32xf32>
    %c32 = arith.constant 32 : index
    %c0_23 = arith.constant 0 : index
    %54 = vector.load %arg4[%c32, %c0_23] : memref<128x128xf32, #tpu.memory_space<vmem>>, vector<32x128xf32>
    %cst_24 = arith.constant dense<0.000000e+00> : vector<8x128xf32>
    %55 = tpu.matmul %53, %54, %cst_24 {dimension_numbers = #tpu.dot_dimension_numbers<[1], [0], [0], [1], [0, 0, 1, 1], [], []>} : vector<8x32xf32>, vector<32x128xf32>, vector<8x128xf32> -> vector<8x128xf32>
    %56 = arith.addf %34, %55 : vector<8x128xf32>
    %57 = vector.extract_strided_slice %6 {offsets = [0, 64], sizes = [8, 32], strides = [1, 1]} : vector<8x384xf32> to vector<8x32xf32>
    %cst_25 = arith.constant 0.176776692 : f32
    %58 = vector.broadcast %cst_25 : f32 to vector<8x32xf32>
    %59 = arith.mulf %57, %58 : vector<8x32xf32>
    %60 = vector.extract_strided_slice %6 {offsets = [0, 192], sizes = [8, 32], strides = [1, 1]} : vector<8x384xf32> to vector<8x32xf32>
    %61 = vector.extract_strided_slice %6 {offsets = [0, 320], sizes = [8, 32], strides = [1, 1]} : vector<8x384xf32> to vector<8x32xf32>
    %cst_26 = arith.constant dense<0.000000e+00> : vector<8x8xf32>
    %62 = tpu.matmul %59, %60, %cst_26 {dimension_numbers = #tpu.dot_dimension_numbers<[1], [1], [0], [0], [0, 0, 1, 0], [], []>} : vector<8x32xf32>, vector<8x32xf32>, vector<8x8xf32> -> vector<8x8xf32>
    %cst_27 = arith.constant -1.000000e+30 : f32
    %63 = vector.broadcast %cst_27 : f32 to vector<8x8xf32>
    %64 = arith.select %9, %62, %63 : vector<8x8xi1>, vector<8x8xf32>
    %cst_28 = arith.constant dense<0xFF800000> : vector<8xf32>
    %65 = vector.multi_reduction <maximumf>, %64, %cst_28 [1] : vector<8x8xf32> to vector<8xf32>
    %66 = vector.shape_cast %65 : vector<8xf32> to vector<8x1xf32>
    %67 = vector.broadcast %66 : vector<8x1xf32> to vector<8x8xf32>
    %68 = arith.subf %64, %67 : vector<8x8xf32>
    %69 = math.exp %68 : vector<8x8xf32>
    %cst_29 = arith.constant dense<0.000000e+00> : vector<8xf32>
    %70 = vector.multi_reduction <add>, %69, %cst_29 [1] : vector<8x8xf32> to vector<8xf32>
    %71 = vector.shape_cast %70 : vector<8xf32> to vector<8x1xf32>
    %72 = tpu.reciprocal %71 {approx = true} : vector<8x1xf32> -> vector<8x1xf32>
    %73 = vector.broadcast %72 : vector<8x1xf32> to vector<8x8xf32>
    %74 = arith.mulf %69, %73 : vector<8x8xf32>
    %cst_30 = arith.constant dense<0.000000e+00> : vector<8x32xf32>
    %75 = tpu.matmul %74, %61, %cst_30 {dimension_numbers = #tpu.dot_dimension_numbers<[1], [0], [0], [1], [0, 0, 1, 1], [], []>} : vector<8x8xf32>, vector<8x32xf32>, vector<8x32xf32> -> vector<8x32xf32>
    %c64 = arith.constant 64 : index
    %c0_31 = arith.constant 0 : index
    %76 = vector.load %arg4[%c64, %c0_31] : memref<128x128xf32, #tpu.memory_space<vmem>>, vector<32x128xf32>
    %cst_32 = arith.constant dense<0.000000e+00> : vector<8x128xf32>
    %77 = tpu.matmul %75, %76, %cst_32 {dimension_numbers = #tpu.dot_dimension_numbers<[1], [0], [0], [1], [0, 0, 1, 1], [], []>} : vector<8x32xf32>, vector<32x128xf32>, vector<8x128xf32> -> vector<8x128xf32>
    %78 = arith.addf %56, %77 : vector<8x128xf32>
    %79 = vector.extract_strided_slice %6 {offsets = [0, 96], sizes = [8, 32], strides = [1, 1]} : vector<8x384xf32> to vector<8x32xf32>
    %cst_33 = arith.constant 0.176776692 : f32
    %80 = vector.broadcast %cst_33 : f32 to vector<8x32xf32>
    %81 = arith.mulf %79, %80 : vector<8x32xf32>
    %82 = vector.extract_strided_slice %6 {offsets = [0, 224], sizes = [8, 32], strides = [1, 1]} : vector<8x384xf32> to vector<8x32xf32>
    %83 = vector.extract_strided_slice %6 {offsets = [0, 352], sizes = [8, 32], strides = [1, 1]} : vector<8x384xf32> to vector<8x32xf32>
    %cst_34 = arith.constant dense<0.000000e+00> : vector<8x8xf32>
    %84 = tpu.matmul %81, %82, %cst_34 {dimension_numbers = #tpu.dot_dimension_numbers<[1], [1], [0], [0], [0, 0, 1, 0], [], []>} : vector<8x32xf32>, vector<8x32xf32>, vector<8x8xf32> -> vector<8x8xf32>
    %cst_35 = arith.constant -1.000000e+30 : f32
    %85 = vector.broadcast %cst_35 : f32 to vector<8x8xf32>
    %86 = arith.select %9, %84, %85 : vector<8x8xi1>, vector<8x8xf32>
    %cst_36 = arith.constant dense<0xFF800000> : vector<8xf32>
    %87 = vector.multi_reduction <maximumf>, %86, %cst_36 [1] : vector<8x8xf32> to vector<8xf32>
    %88 = vector.shape_cast %87 : vector<8xf32> to vector<8x1xf32>
    %89 = vector.broadcast %88 : vector<8x1xf32> to vector<8x8xf32>
    %90 = arith.subf %86, %89 : vector<8x8xf32>
    %91 = math.exp %90 : vector<8x8xf32>
    %cst_37 = arith.constant dense<0.000000e+00> : vector<8xf32>
    %92 = vector.multi_reduction <add>, %91, %cst_37 [1] : vector<8x8xf32> to vector<8xf32>
    %93 = vector.shape_cast %92 : vector<8xf32> to vector<8x1xf32>
    %94 = tpu.reciprocal %93 {approx = true} : vector<8x1xf32> -> vector<8x1xf32>
    %95 = vector.broadcast %94 : vector<8x1xf32> to vector<8x8xf32>
    %96 = arith.mulf %91, %95 : vector<8x8xf32>
    %cst_38 = arith.constant dense<0.000000e+00> : vector<8x32xf32>
    %97 = tpu.matmul %96, %83, %cst_38 {dimension_numbers = #tpu.dot_dimension_numbers<[1], [0], [0], [1], [0, 0, 1, 1], [], []>} : vector<8x8xf32>, vector<8x32xf32>, vector<8x32xf32> -> vector<8x32xf32>
    %c96 = arith.constant 96 : index
    %c0_39 = arith.constant 0 : index
    %98 = vector.load %arg4[%c96, %c0_39] : memref<128x128xf32, #tpu.memory_space<vmem>>, vector<32x128xf32>
    %cst_40 = arith.constant dense<0.000000e+00> : vector<8x128xf32>
    %99 = tpu.matmul %97, %98, %cst_40 {dimension_numbers = #tpu.dot_dimension_numbers<[1], [0], [0], [1], [0, 0, 1, 1], [], []>} : vector<8x32xf32>, vector<32x128xf32>, vector<8x128xf32> -> vector<8x128xf32>
    %100 = arith.addf %78, %99 : vector<8x128xf32>
    %c0_41 = arith.constant 0 : index
    %c0_42 = arith.constant 0 : index
    %c0_43 = arith.constant 0 : index
    %101 = vector.load %arg6[%c0_41, %c0_42, %c0_43] : memref<1x8x128xf32, #tpu.memory_space<vmem>>, vector<1x8x128xf32>
    %102 = vector.shape_cast %101 : vector<1x8x128xf32> to vector<8x128xf32>
    %103 = vector.shape_cast %100 : vector<8x128xf32> to vector<1x8x128xf32>
    tpu.vector_store %arg6[%c0_41, %c0_42, %c0_43], %103 {strides = array<i32>} : memref<1x8x128xf32, #tpu.memory_space<vmem>>, vector<1x8x128xf32>,
    return
  }
  func.func @transform_0(%arg0: i32) -> (i32, i32, i32) {
    %c0_i32 = arith.constant 0 : i32
    %c0_i32_0 = arith.constant 0 : i32
    %c0_i32_1 = arith.constant 0 : i32
    return %arg0, %c0_i32, %c0_i32_0 : i32, i32, i32
  }
  func.func @transform_1(%arg0: i32) -> (i32, i32) {
    %c0_i32 = arith.constant 0 : i32
    %c0_i32_0 = arith.constant 0 : i32
    %c0_i32_1 = arith.constant 0 : i32
    return %c0_i32, %c0_i32_0 : i32, i32
  }
  func.func @transform_2(%arg0: i32) -> (i32, i32) {
    %c0_i32 = arith.constant 0 : i32
    %c0_i32_0 = arith.constant 0 : i32
    %c0_i32_1 = arith.constant 0 : i32
    return %c0_i32, %c0_i32_0 : i32, i32
  }
  func.func @transform_3(%arg0: i32) -> (i32, i32) {
    %c0_i32 = arith.constant 0 : i32
    %c0_i32_0 = arith.constant 0 : i32
    %c0_i32_1 = arith.constant 0 : i32
    return %c0_i32, %c0_i32_0 : i32, i32
  }
  func.func @transform_4(%arg0: i32) -> (i32, i32) {
    %c0_i32 = arith.constant 0 : i32
    %c0_i32_0 = arith.constant 0 : i32
    %c0_i32_1 = arith.constant 0 : i32
    return %c0_i32, %c0_i32_0 : i32, i32
  }
  func.func @transform_5(%arg0: i32) -> (i32, i32, i32) {
    %c0_i32 = arith.constant 0 : i32
    %c0_i32_0 = arith.constant 0 : i32
    %c0_i32_1 = arith.constant 0 : i32
    return %arg0, %c0_i32, %c0_i32_0 : i32, i32, i32
  }
}

</mosaic_0001>

<llo_original>
// kernel: tpu_custom_call.1
$region0: #{tpu_custom_call.1}
  #allocation0 [shape = 'u32[]', space=smem, size = 0x4, offset = 0x4, fixed_abs, tag = 'smem constant byte address 0x4 - core index']
  #allocation1 [shape = 'u32[72,128]{1,0:T(1,128)}', space=vmem, size = 0x9000, scoped, tag = 'internal scratch']
  %s0 = inlined_call_operand.hbm [shape: f32[2,8,128], index: 0, kind: input, shape index: {}]
  %s1 = inlined_call_operand.hbm [shape: f32[128,384], index: 1, kind: input, shape index: {}]
  %s2 = inlined_call_operand.hbm [shape: f32[1,384], index: 2, kind: input, shape index: {}]
  %s3 = inlined_call_operand.hbm [shape: f32[128,128], index: 3, kind: input, shape index: {}]
  %s4 = inlined_call_operand.vmem [shape: f32[1,128], index: 4, kind: input, shape index: {}]
  %s5 = inlined_call_operand.hbm [shape: f32[2,8,128], index: 5, kind: output, shape index: {}]
  %s6 = sld [smem:[#allocation0]]
  $region69: #{tpu_custom_call.1} parent=0
    _
  %s8 = ssub.s32 1, %s6
  %s9 = scalar_select 0, %s8, %s6
  $region1: #{tpu_custom_call.1} parent=0
    #allocation2 [shape = 'u8[8192]{0}', space=vmem, size = 0x2000, scoped, tag = 'input window, operand 0']
    #allocation3 [shape = 's32[2]{0}', space=sflag, size = 0x8, scoped, tag = 'scoped memory for tpu_custom_call.1']
    #allocation4 [shape = 's32[2]{0}', space=sflag, size = 0x8, scoped, tag = 'scoped memory for tpu_custom_call.1']
    #allocation5 [shape = 'u8[196608]{0}', space=vmem, size = 0x30000, scoped, tag = 'input window, operand 1, single buffered']
    #allocation6 [shape = 's32[1]{0}', space=sflag, size = 0x4, scoped, tag = 'scoped memory for tpu_custom_call.1']
    #allocation7 [shape = 'u8[1536]{0}', space=vmem, size = 0x800, scoped, tag = 'input window, operand 2, single buffered']
    #allocation8 [shape = 'u8[65536]{0}', space=vmem, size = 0x10000, scoped, tag = 'input window, operand 3, single buffered']
    #allocation9 [shape = 's32[1]{0}', space=sflag, size = 0x4, scoped, tag = 'scoped memory for tpu_custom_call.1']
    #allocation10 [shape = 'u8[8192]{0}', space=vmem, size = 0x2000, scoped, tag = 'output window, operand 0']
    %10 = vsyncpa [#allocation3], 0
    %s11 = scalar_lea.sflag [#allocation3], 1
    %12 = vsyncpa %s11, 0
    %13 = vsyncpa [#allocation6], 0
    %14 = vsyncpa [#allocation9], 0
    %15 = vsyncpa [#allocation4], 0
    %s16 = scalar_lea.sflag [#allocation4], 1
    %17 = vsyncpa %s16, 0
    loop: start=0, step=1, limit=4
    $region2: #{tpu_custom_call.1} parent=1 // loop_pre_header
      _
    $region3: #{tpu_custom_call.1} parent=1 // loop_header
      %s19 = sphi 0, %s23
      %p20 = scmp.ge.s32.totalorder %s19, 4
      %s29 = sphi 0, %s31
      %s32 = sphi 0, %s29
      %s33 = sphi 0, %s32
      %s49 = sphi 0, %s33
      %s53 = sphi 0, %s53
      %s55 = sphi 0, %s53
      %s56 = sphi 0, %s55
      %s70 = sphi 0, %s56
      %s74 = sphi 0, %s74
      %s76 = sphi 0, %s74
      %s77 = sphi 0, %s76
      %s91 = sphi 0, %s77
      %s95 = sphi 0, %s95
      %s97 = sphi 0, %s95
      %s98 = sphi 0, %s97
      %s112 = sphi 0, %s98
      %s116 = sphi 0, %s116
      %s118 = sphi 0, %s116
      %s119 = sphi 0, %s118
      %s133 = sphi 0, %s119
      %s139 = sphi 0, %s141
      %s142 = sphi 0, %s139
      %s143 = sphi 0, %s142
      %s159 = sphi 0, %s143
    $region4: #{tpu_custom_call.1} parent=1 // loop_header_branch
      %22 = sbr.rel (%p20) target = $region8
    $region5: #{tpu_custom_call.1} parent=1 // loop_body
      %s24 = ssub.s32 %s19, 1
      %s25 = ssub.s32 %s19, 2
      %s26 = sadd.s32 %s19, 1
      %s27 = ssub.s32 %s19, %s26
      %p28 = scmp.eq.s32.totalorder %s27, 0
      %s30 = sadd.s32 %s29, 1
      %s31 = scalar_select %p28, %s29, %s30
      %p34 = pneg %p28
      %p35 = scmp.eq.s32.totalorder %s19, 1
      %p36 = por %p34, %p35
      %p37 = scmp.ne.s32.totalorder %s29, %s32
      %p38 = scmp.eq.s32.totalorder %s19, 0
      %p39 = por %p37, %p38
      %p40 = scmp.ne.s32.totalorder %s29, %s32
      %p41 = scmp.eq.s32.totalorder %s24, 1
      %p42 = por %p40, %p41
      %p43 = scmp.ne.s32.totalorder %s32, %s33
      %p44 = scmp.eq.s32.totalorder %s24, 0
      %p45 = por %p43, %p44
      %p46 = scmp.ne.s32.totalorder %s32, %s33
      %p47 = scmp.eq.s32.totalorder %s25, 1
      %p48 = por %p46, %p47
      %p50 = scmp.ne.s32.totalorder %s33, %s49
      %p51 = scmp.eq.s32.totalorder %s25, 0
      %p52 = por %p50, %p51
      %s54 = sadd.s32 %s53, 1
      %p57 = scmp.eq.s32.totalorder %s19, 1
      %p58 = scmp.ne.s32.totalorder %s53, %s55
      %p59 = scmp.eq.s32.totalorder %s19, 0
      %p60 = por %p58, %p59
      %p61 = scmp.ne.s32.totalorder %s53, %s55
      %p62 = scmp.eq.s32.totalorder %s24, 1
      %p63 = por %p61, %p62
      %p64 = scmp.ne.s32.totalorder %s55, %s56
      %p65 = scmp.eq.s32.totalorder %s24, 0
      %p66 = por %p64, %p65
      %p67 = scmp.ne.s32.totalorder %s55, %s56
      %p68 = scmp.eq.s32.totalorder %s25, 1
      %p69 = por %p67, %p68
      %p71 = scmp.ne.s32.totalorder %s56, %s70
      %p72 = scmp.eq.s32.totalorder %s25, 0
      %p73 = por %p71, %p72
      %s75 = sadd.s32 %s74, 1
      %p78 = scmp.eq.s32.totalorder %s19, 1
      %p79 = scmp.ne.s32.totalorder %s74, %s76
      %p80 = scmp.eq.s32.totalorder %s19, 0
      %p81 = por %p79, %p80
      %p82 = scmp.ne.s32.totalorder %s74, %s76
      %p83 = scmp.eq.s32.totalorder %s24, 1
      %p84 = por %p82, %p83
      %p85 = scmp.ne.s32.totalorder %s76, %s77
      %p86 = scmp.eq.s32.totalorder %s24, 0
      %p87 = por %p85, %p86
      %p88 = scmp.ne.s32.totalorder %s76, %s77
      %p89 = scmp.eq.s32.totalorder %s25, 1
      %p90 = por %p88, %p89
      %p92 = scmp.ne.s32.totalorder %s77, %s91
      %p93 = scmp.eq.s32.totalorder %s25, 0
      %p94 = por %p92, %p93
      %s96 = sadd.s32 %s95, 1
      %p99 = scmp.eq.s32.totalorder %s19, 1
      %p100 = scmp.ne.s32.totalorder %s95, %s97
      %p101 = scmp.eq.s32.totalorder %s19, 0
      %p102 = por %p100, %p101
      %p103 = scmp.ne.s32.totalorder %s95, %s97
      %p104 = scmp.eq.s32.totalorder %s24, 1
      %p105 = por %p103, %p104
      %p106 = scmp.ne.s32.totalorder %s97, %s98
      %p107 = scmp.eq.s32.totalorder %s24, 0
      %p108 = por %p106, %p107
      %p109 = scmp.ne.s32.totalorder %s97, %s98
      %p110 = scmp.eq.s32.totalorder %s25, 1
      %p111 = por %p109, %p110
      %p113 = scmp.ne.s32.totalorder %s98, %s112
      %p114 = scmp.eq.s32.totalorder %s25, 0
      %p115 = por %p113, %p114
      %s117 = sadd.s32 %s116, 1
      %p120 = scmp.eq.s32.totalorder %s19, 1
      %p121 = scmp.ne.s32.totalorder %s116, %s118
      %p122 = scmp.eq.s32.totalorder %s19, 0
      %p123 = por %p121, %p122
      %p124 = scmp.ne.s32.totalorder %s116, %s118
      %p125 = scmp.eq.s32.totalorder %s24, 1
      %p126 = por %p124, %p125
      %p127 = scmp.ne.s32.totalorder %s118, %s119
      %p128 = scmp.eq.s32.totalorder %s24, 0
      %p129 = por %p127, %p128
      %p130 = scmp.ne.s32.totalorder %s118, %s119
      %p131 = scmp.eq.s32.totalorder %s25, 1
      %p132 = por %p130, %p131
      %p134 = scmp.ne.s32.totalorder %s119, %s133
      %p135 = scmp.eq.s32.totalorder %s25, 0
      %p136 = por %p134, %p135
      %s137 = ssub.s32 %s19, %s26
      %p138 = scmp.eq.s32.totalorder %s137, 0
      %s140 = sadd.s32 %s139, 1
      %s141 = scalar_select %p138, %s139, %s140
      %p144 = pneg %p138
      %p145 = scmp.eq.s32.totalorder %s19, 1
      %p146 = por %p144, %p145
      %p147 = scmp.ne.s32.totalorder %s139, %s142
      %p148 = scmp.eq.s32.totalorder %s19, 0
      %p149 = por %p147, %p148
      %p150 = scmp.ne.s32.totalorder %s139, %s142
      %p151 = scmp.eq.s32.totalorder %s24, 1
      %p152 = por %p150, %p151
      %p153 = scmp.ne.s32.totalorder %s142, %s143
      %p154 = scmp.eq.s32.totalorder %s24, 0
      %p155 = por %p153, %p154
      %p156 = scmp.ne.s32.totalorder %s142, %s143
      %p157 = scmp.eq.s32.totalorder %s25, 1
      %p158 = por %p156, %p157
      %p160 = scmp.ne.s32.totalorder %s143, %s159
      %p161 = scmp.eq.s32.totalorder %s25, 0
      %p162 = por %p160, %p161
      %p163 = scmp.le.s32.totalorder 1, %s19
      %p164 = scmp.lt.s32.totalorder %s19, 3
      %p165 = pnand %p163, %p164
      %p166 = pneg %p165
      // Predicated region
      $region9: #{tpu_custom_call.1} parent=5 // pred_check
        _
      $region10: #{tpu_custom_call.1} parent=5 // pred_check_branch
        %168 = sbr.rel (%p165) target = $region12
      $region11: #{tpu_custom_call.1} parent=5 // pred_region
        %s169 = ssub.s32 %s19, 1
        // Predicated region
        $region13: #{tpu_custom_call.1} parent=11 // pred_check
          %p170 = pneg %p66
        $region14: #{tpu_custom_call.1} parent=11 // pred_check_branch
          %172 = sbr.rel (%p170) target = $region16
        $region15: #{tpu_custom_call.1} parent=11 // pred_region
          %174 = vsyncadd [#allocation6], 0
          %s175 = sshll.u32 %s1, 4
          %s176 = int_to_ptr.hbm [resolvable:$true] %s175
          %s177 = sshll.u32 [#allocation5], 4
          %s178 = int_to_ptr.vmem [resolvable:$true] %s177
          %183 = dma.hbm_to_vmem [thread:$0]  %s176, 6144, %s178, [#allocation6], 384, 384, 24
        $region16: #{tpu_custom_call.1} parent=11 // pred_fallthru
          _
        // Predicated region
        $region17: #{tpu_custom_call.1} parent=11 // pred_check
          %p184 = pneg %p87
        $region18: #{tpu_custom_call.1} parent=11 // pred_check_branch
          %186 = sbr.rel (%p184) target = $region20
        $region19: #{tpu_custom_call.1} parent=11 // pred_region
          %188 = vsyncadd [#allocation6], 0
          %s190 = sshll.u32 %s2, 4
          %s191 = int_to_ptr.hbm [resolvable:$true] %s190
          %s192 = sshll.u32 [#allocation7], 4
          %s193 = int_to_ptr.vmem [resolvable:$true] %s192
          %195 = dma.hbm_to_vmem [thread:$0]  %s191, 48, %s193, [#allocation6]
        $region20: #{tpu_custom_call.1} parent=11 // pred_fallthru
          _
        // Predicated region
        $region21: #{tpu_custom_call.1} parent=11 // pred_check
          %p196 = pneg %p108
        $region22: #{tpu_custom_call.1} parent=11 // pred_check_branch
          %198 = sbr.rel (%p196) target = $region24
        $region23: #{tpu_custom_call.1} parent=11 // pred_region
          %200 = vsyncadd [#allocation9], 0
          %s201 = sshll.u32 %s3, 4
          %s202 = int_to_ptr.hbm [resolvable:$true] %s201
          %s203 = sshll.u32 [#allocation8], 4
          %s204 = int_to_ptr.vmem [resolvable:$true] %s203
          %209 = dma.hbm_to_vmem [thread:$0]  %s202, 2048, %s204, [#allocation9], 128, 128, 8
        $region24: #{tpu_custom_call.1} parent=11 // pred_fallthru
          _
        // Predicated region
        $region25: #{tpu_custom_call.1} parent=11 // pred_check
          %p210 = pneg %p129
        $region26: #{tpu_custom_call.1} parent=11 // pred_check_branch
          %212 = sbr.rel (%p210) target = $region28
        $region27: #{tpu_custom_call.1} parent=11 // pred_region
          _
        $region28: #{tpu_custom_call.1} parent=11 // pred_fallthru
          _
      $region12: #{tpu_custom_call.1} parent=5 // pred_fallthru
        _
      %p213 = scmp.lt.s32.totalorder %s19, 2
      // Predicated region
      $region29: #{tpu_custom_call.1} parent=5 // pred_check
        %p214 = pneg %p213
      $region30: #{tpu_custom_call.1} parent=5 // pred_check_branch
        %216 = sbr.rel (%p214) target = $region32
      $region31: #{tpu_custom_call.1} parent=5 // pred_region
        // Predicated region
        $region33: #{tpu_custom_call.1} parent=31 // pred_check
          %p217 = pneg %p39
        $region34: #{tpu_custom_call.1} parent=31 // pred_check_branch
          %219 = sbr.rel (%p217) target = $region36
        $region35: #{tpu_custom_call.1} parent=31 // pred_region
          %s220 = sand.u32 %s29, 1
          %s221 = scalar_lea.sflag [#allocation3], %s220
          %s222 = sand.u32 %s29, 1
          %s223 = smul.addr %s222, 8
          %s224 = scalar_lea.vmem [#allocation2], %s223
          %226 = vsyncadd %s221, 0
          %s227 = smul.addr %s19, 8
          %s228 = scalar_lea.hbm %s0, %s227
          %s230 = sshll.u32 %s228, 4
          %s231 = int_to_ptr.hbm [resolvable:$true] %s230
          %s232 = sshll.u32 %s224, 4
          %s233 = int_to_ptr.vmem [resolvable:$true] %s232
          %235 = dma.hbm_to_vmem [thread:$0]  %s231, 128, %s233, %s221
        $region36: #{tpu_custom_call.1} parent=31 // pred_fallthru
          _
      $region32: #{tpu_custom_call.1} parent=5 // pred_fallthru
        _
      %p236 = scmp.le.s32.totalorder 1, %s19
      %p237 = scmp.lt.s32.totalorder %s19, 3
      %p238 = pnand %p236, %p237
      %p239 = pneg %p238
      // Predicated region
      $region37: #{tpu_custom_call.1} parent=5 // pred_check
        _
      $region38: #{tpu_custom_call.1} parent=5 // pred_check_branch
        %241 = sbr.rel (%p238) target = $region40
      $region39: #{tpu_custom_call.1} parent=5 // pred_region
        %s242 = ssub.s32 %s19, 1
        %s243 = sand.u32 %s32, 1
        %s244 = scalar_lea.sflag [#allocation3], %s243
        %s245 = sand.u32 %s32, 1
        %s246 = smul.addr %s245, 8
        %s247 = scalar_lea.vmem [#allocation2], %s246
        // Predicated region
        $region41: #{tpu_custom_call.1} parent=39 // pred_check
          %p248 = pneg %p45
        $region42: #{tpu_custom_call.1} parent=39 // pred_check_branch
          %250 = sbr.rel (%p248) target = $region44
        $region43: #{tpu_custom_call.1} parent=39 // pred_region
          %252 = dma.done %s244, 128
        $region44: #{tpu_custom_call.1} parent=39 // pred_fallthru
          _
        // Predicated region
        $region45: #{tpu_custom_call.1} parent=39 // pred_check
          %p253 = pneg %p66
        $region46: #{tpu_custom_call.1} parent=39 // pred_check_branch
          %255 = sbr.rel (%p253) target = $region48
        $region47: #{tpu_custom_call.1} parent=39 // pred_region
          %257 = dma.done [#allocation6], 6144
        $region48: #{tpu_custom_call.1} parent=39 // pred_fallthru
          _
        // Predicated region
        $region49: #{tpu_custom_call.1} parent=39 // pred_check
          %p258 = pneg %p87
        $region50: #{tpu_custom_call.1} parent=39 // pred_check_branch
          %260 = sbr.rel (%p258) target = $region52
        $region51: #{tpu_custom_call.1} parent=39 // pred_region
          %262 = dma.done [#allocation6], 48
        $region52: #{tpu_custom_call.1} parent=39 // pred_fallthru
          _
        // Predicated region
        $region53: #{tpu_custom_call.1} parent=39 // pred_check
          %p263 = pneg %p108
        $region54: #{tpu_custom_call.1} parent=39 // pred_check_branch
          %265 = sbr.rel (%p263) target = $region56
        $region55: #{tpu_custom_call.1} parent=39 // pred_region
          %267 = dma.done [#allocation9], 2048
        $region56: #{tpu_custom_call.1} parent=39 // pred_fallthru
          _
        %s268 = sand.u32 %s32, 1
        %s269 = scalar_lea.sflag [#allocation3], %s268
        %s270 = sand.u32 %s32, 1
        %s271 = smul.addr %s270, 8
        %s272 = scalar_lea.vmem [#allocation2], %s271
        %p273 = pneg %p45
        %p274 = pneg %p42
        %p275 = pneg %p66
        %p276 = pneg %p63
        %p277 = pneg %p87
        %p278 = pneg %p84
        %p279 = pneg %p108
        %p280 = pneg %p105
        %p281 = pneg %p129
        %p282 = pneg %p126
        %p283 = pneg %p155
        %p284 = pneg %p152
        %s285 = sand.u32 %s142, 1
        %s286 = scalar_lea.sflag [#allocation4], %s285
        %s287 = sand.u32 %s142, 1
        %s288 = smul.addr %s287, 8
        %s289 = scalar_lea.vmem [#allocation10], %s288
        %v290 = vld [vmem:[%s247] sm:$0xff]
        %v291 = vld [vmem:[#allocation5] sm:$0xff]
        %v292 = vld [vmem:[#allocation5 + $0x8] sm:$0xff]
        %v293 = vld [vmem:[#allocation5 + $0x10] sm:$0xff]
        %v294 = vld [vmem:[#allocation5 + $0x18] sm:$0xff]
        %v295 = vld [vmem:[#allocation5 + $0x20] sm:$0xff]
        %v296 = vld [vmem:[#allocation5 + $0x28] sm:$0xff]
        %v297 = vld [vmem:[#allocation5 + $0x30] sm:$0xff]
        %v298 = vld [vmem:[#allocation5 + $0x38] sm:$0xff]
        %v299 = vld [vmem:[#allocation5 + $0x40] sm:$0xff]
        %v300 = vld [vmem:[#allocation5 + $0x48] sm:$0xff]
        %v301 = vld [vmem:[#allocation5 + $0x50] sm:$0xff]
        %v302 = vld [vmem:[#allocation5 + $0x58] sm:$0xff]
        %v303 = vld [vmem:[#allocation5 + $0x60] sm:$0xff]
        %v304 = vld [vmem:[#allocation5 + $0x68] sm:$0xff]
        %v305 = vld [vmem:[#allocation5 + $0x70] sm:$0xff]
        %v306 = vld [vmem:[#allocation5 + $0x78] sm:$0xff]
        %v307 = vld [vmem:[#allocation5 + $0x80] sm:$0xff]
        %v308 = vld [vmem:[#allocation5 + $0x88] sm:$0xff]
        %v309 = vld [vmem:[#allocation5 + $0x90] sm:$0xff]
        %v310 = vld [vmem:[#allocation5 + $0x98] sm:$0xff]
        %v311 = vld [vmem:[#allocation5 + $0xa0] sm:$0xff]
        %v312 = vld [vmem:[#allocation5 + $0xa8] sm:$0xff]
        %v313 = vld [vmem:[#allocation5 + $0xb0] sm:$0xff]
        %v314 = vld [vmem:[#allocation5 + $0xb8] sm:$0xff]
        %v315 = vld [vmem:[#allocation5 + $0xc0] sm:$0xff]
        %v316 = vld [vmem:[#allocation5 + $0xc8] sm:$0xff]
        %v317 = vld [vmem:[#allocation5 + $0xd0] sm:$0xff]
        %v318 = vld [vmem:[#allocation5 + $0xd8] sm:$0xff]
        %v319 = vld [vmem:[#allocation5 + $0xe0] sm:$0xff]
        %v320 = vld [vmem:[#allocation5 + $0xe8] sm:$0xff]
        %v321 = vld [vmem:[#allocation5 + $0xf0] sm:$0xff]
        %v322 = vld [vmem:[#allocation5 + $0xf8] sm:$0xff]
        %v323 = vld [vmem:[#allocation5 + $0x100] sm:$0xff]
        %v324 = vld [vmem:[#allocation5 + $0x108] sm:$0xff]
        %v325 = vld [vmem:[#allocation5 + $0x110] sm:$0xff]
        %v326 = vld [vmem:[#allocation5 + $0x118] sm:$0xff]
        %v327 = vld [vmem:[#allocation5 + $0x120] sm:$0xff]
        %v328 = vld [vmem:[#allocation5 + $0x128] sm:$0xff]
        %v329 = vld [vmem:[#allocation5 + $0x130] sm:$0xff]
        %v330 = vld [vmem:[#allocation5 + $0x138] sm:$0xff]
        %v331 = vld [vmem:[#allocation5 + $0x140] sm:$0xff]
        %v332 = vld [vmem:[#allocation5 + $0x148] sm:$0xff]
        %v333 = vld [vmem:[#allocation5 + $0x150] sm:$0xff]
        %v334 = vld [vmem:[#allocation5 + $0x158] sm:$0xff]
        %v335 = vld [vmem:[#allocation5 + $0x160] sm:$0xff]
        %v336 = vld [vmem:[#allocation5 + $0x168] sm:$0xff]
        %v337 = vld [vmem:[#allocation5 + $0x170] sm:$0xff]
        %v338 = vld [vmem:[#allocation5 + $0x178] sm:$0xff]
        %v339 = vld [vmem:[#allocation7] sm:$0x7]
        %v341 = vperm.slane %v339, 0
        %v342 = vperm.slane %v339, 1
        %v343 = vperm.slane %v339, 2
        %347 = vmatpush.msra.mxu0 %v336
        %348 = vmatpush.msra.mxu0 %v333
        %349 = vmatpush.msra.mxu0 %v330
        %350 = vmatpush.msra.mxu0 %v327
        %351 = vmatpush.msra.mxu0 %v324
        %352 = vmatpush.msra.mxu0 %v321
        %353 = vmatpush.msra.mxu0 %v318
        %354 = vmatpush.msra.mxu0 %v315
        %355 = vmatpush.msra.mxu0 %v312
        %356 = vmatpush.msra.mxu0 %v309
        %357 = vmatpush.msra.mxu0 %v306
        %358 = vmatpush.msra.mxu0 %v303
        %359 = vmatpush.msra.mxu0 %v300
        %360 = vmatpush.msra.mxu0 %v297
        %361 = vmatpush.msra.mxu0 %v294
        %362 = vmatpush.msra.mxu0 %v291
        %363 = vmatmul.f32.gmra.mxu0 %v290
        %v364 = vpop.f32.mrf.mxu0
        %v365 = vadd.f32 %v341, %v364
        %366 = vdwg.mxu0
        %367 = vmatpush.msra.mxu0 %v337
        %368 = vmatpush.msra.mxu0 %v334
        %369 = vmatpush.msra.mxu0 %v331
        %370 = vmatpush.msra.mxu0 %v328
        %371 = vmatpush.msra.mxu0 %v325
        %372 = vmatpush.msra.mxu0 %v322
        %373 = vmatpush.msra.mxu0 %v319
        %374 = vmatpush.msra.mxu0 %v316
        %375 = vmatpush.msra.mxu0 %v313
        %376 = vmatpush.msra.mxu0 %v310
        %377 = vmatpush.msra.mxu0 %v307
        %378 = vmatpush.msra.mxu0 %v304
        %379 = vmatpush.msra.mxu0 %v301
        %380 = vmatpush.msra.mxu0 %v298
        %381 = vmatpush.msra.mxu0 %v295
        %382 = vmatpush.msra.mxu0 %v292
        %383 = vmatmul.f32.gmra.mxu0 %v290
        %v384 = vpop.f32.mrf.mxu0
        %v385 = vadd.f32 %v342, %v384
        %386 = vdwg.mxu0
        %387 = vmatpush.msra.mxu0 %v338
        %388 = vmatpush.msra.mxu0 %v335
        %389 = vmatpush.msra.mxu0 %v332
        %390 = vmatpush.msra.mxu0 %v329
        %391 = vmatpush.msra.mxu0 %v326
        %392 = vmatpush.msra.mxu0 %v323
        %393 = vmatpush.msra.mxu0 %v320
        %394 = vmatpush.msra.mxu0 %v317
        %395 = vmatpush.msra.mxu0 %v314
        %396 = vmatpush.msra.mxu0 %v311
        %397 = vmatpush.msra.mxu0 %v308
        %398 = vmatpush.msra.mxu0 %v305
        %399 = vmatpush.msra.mxu0 %v302
        %400 = vmatpush.msra.mxu0 %v299
        %401 = vmatpush.msra.mxu0 %v296
        %402 = vmatpush.msra.mxu0 %v293
        %403 = vmatmul.f32.gmra.mxu0 %v290
        %v404 = vpop.f32.mrf.mxu0
        %v405 = vadd.f32 %v343, %v404
        %406 = vdwg.mxu0
        %v407 = vlaneseq
        %v408 = vshrl.u32 %v407, 7
        %v409 = vlaneseq
        %v410 = vand.u32 %v409, 127
        %vm411 = vcmp.ge.s32.totalorder %v408, %v410
        %v412 = vld [vmem:[%s4] sm:$0x1]
        %v414 = vperm.slane %v412, 0
        %v416 = vmul.f32 %v365, 0.17677669
        %vm417 = vcmask 261120
        %v419 = vsel %vm417, %v416, 0
        %v422 = vsel %vm417, %v385, 0
        %424 = vmatpush.xpose.msra.mxu0 0.0
        %425 = vmatpush.xpose.msra.mxu0 0.0
        %426 = vmatpush.xpose.msra.mxu0 0.0
        %427 = vmatpush.xpose.msra.mxu0 0.0
        %428 = vmatpush.xpose.msra.mxu0 0.0
        %429 = vmatpush.xpose.msra.mxu0 0.0
        %430 = vmatpush.xpose.msra.mxu0 0.0
        %431 = vmatpush.xpose.msra.mxu0 0.0
        %432 = vmatpush.xpose.msra.mxu0 0.0
        %433 = vmatpush.xpose.msra.mxu0 0.0
        %434 = vmatpush.xpose.msra.mxu0 0.0
        %435 = vmatpush.xpose.msra.mxu0 0.0
        %436 = vmatpush.xpose.msra.mxu0 0.0
        %437 = vmatpush.xpose.msra.mxu0 0.0
        %438 = vmatpush.xpose.msra.mxu0 0.0
        %439 = vmatpush.xpose.msra.mxu0 %v422
        %440 = vmatmul.f32.gmra.mxu0 %v419
        %v441 = vpop.f32.mrf.mxu0
        %v442 = vadd.f32 0.0, %v441
        %443 = vdwg.mxu0
        %v444 = vsel %vm411, %v442, -1e+30
        %vm445 = vcmask 64512
        %v446 = vsel %vm445, %v444, -inf
        %447 = vmax.xlane.f32.xlu0 %v446
        %v448 = vpop.xlane.xlu0 %447
        %v449 = vsub.f32 %v444, %v448
        %v450 = vmul.f32 %v449, 1.442695
        %v451 = vpow.pop %v450
        %v452 = vsel %vm445, %v451, 0.0
        %453 = vadd.xlane.f32.xlu0 %v452
        %v454 = vpop.xlane.xlu0 %453
        %v455 = vrcp.pop %v454
        %v456 = vmul.f32 %v451, %v455
        %v458 = vsel %vm445, %v456, 0
        %460 = vmatpush.msra.mxu0 0.0
        %461 = vmatpush.msra.mxu0 0.0
        %462 = vmatpush.msra.mxu0 0.0
        %463 = vmatpush.msra.mxu0 0.0
        %464 = vmatpush.msra.mxu0 0.0
        %465 = vmatpush.msra.mxu0 0.0
        %466 = vmatpush.msra.mxu0 0.0
        %467 = vmatpush.msra.mxu0 0.0
        %468 = vmatpush.msra.mxu0 0.0
        %469 = vmatpush.msra.mxu0 0.0
        %470 = vmatpush.msra.mxu0 0.0
        %471 = vmatpush.msra.mxu0 0.0
        %472 = vmatpush.msra.mxu0 0.0
        %473 = vmatpush.msra.mxu0 0.0
        %474 = vmatpush.msra.mxu0 0.0
        %475 = vmatpush.msra.mxu0 %v405
        %476 = vmatmul.f32.gmra.mxu0 %v458
        %v477 = vpop.f32.mrf.mxu0
        %v478 = vadd.f32 0.0, %v477
        %479 = vdwg.mxu0
        %v480 = vld [vmem:[#allocation8] sm:$0xff]
        %v481 = vld [vmem:[#allocation8 + $0x8] sm:$0xff]
        %v482 = vld [vmem:[#allocation8 + $0x10] sm:$0xff]
        %v483 = vld [vmem:[#allocation8 + $0x18] sm:$0xff]
        %v485 = vsel %vm417, %v478, 0
        %487 = vmatpush.msra.mxu0 0.0
        %488 = vmatpush.msra.mxu0 0.0
        %489 = vmatpush.msra.mxu0 0.0
        %490 = vmatpush.msra.mxu0 0.0
        %491 = vmatpush.msra.mxu0 0.0
        %492 = vmatpush.msra.mxu0 0.0
        %493 = vmatpush.msra.mxu0 0.0
        %494 = vmatpush.msra.mxu0 0.0
        %495 = vmatpush.msra.mxu0 0.0
        %496 = vmatpush.msra.mxu0 0.0
        %497 = vmatpush.msra.mxu0 0.0
        %498 = vmatpush.msra.mxu0 0.0
        %499 = vmatpush.msra.mxu0 %v483
        %500 = vmatpush.msra.mxu0 %v482
        %501 = vmatpush.msra.mxu0 %v481
        %502 = vmatpush.msra.mxu0 %v480
        %503 = vmatmul.f32.gmra.mxu0 %v485
        %v504 = vpop.f32.mrf.mxu0
        %v505 = vadd.f32 0.0, %v504
        %506 = vdwg.mxu0
        %v507 = vadd.f32 %v414, %v505
        %508 = vrot.lane.b32.xlu0 %v416, 96
        %v509 = vpop.permute.xlu0 %508
        %510 = vrot.lane.b32.xlu0 %v385, 96
        %v511 = vpop.permute.xlu0 %510
        %v512 = vsel %vm417, %v509, 0
        %v514 = vsel %vm417, %v511, 0
        %516 = vmatpush.xpose.msra.mxu0 0.0
        %517 = vmatpush.xpose.msra.mxu0 0.0
        %518 = vmatpush.xpose.msra.mxu0 0.0
        %519 = vmatpush.xpose.msra.mxu0 0.0
        %520 = vmatpush.xpose.msra.mxu0 0.0
        %521 = vmatpush.xpose.msra.mxu0 0.0
        %522 = vmatpush.xpose.msra.mxu0 0.0
        %523 = vmatpush.xpose.msra.mxu0 0.0
        %524 = vmatpush.xpose.msra.mxu0 0.0
        %525 = vmatpush.xpose.msra.mxu0 0.0
        %526 = vmatpush.xpose.msra.mxu0 0.0
        %527 = vmatpush.xpose.msra.mxu0 0.0
        %528 = vmatpush.xpose.msra.mxu0 0.0
        %529 = vmatpush.xpose.msra.mxu0 0.0
        %530 = vmatpush.xpose.msra.mxu0 0.0
        %531 = vmatpush.xpose.msra.mxu0 %v514
        %532 = vmatmul.f32.gmra.mxu0 %v512
        %v533 = vpop.f32.mrf.mxu0
        %v534 = vadd.f32 0.0, %v533
        %535 = vdwg.mxu0
        %v536 = vsel %vm411, %v534, -1e+30
        %v537 = vsel %vm445, %v536, -inf
        %538 = vmax.xlane.f32.xlu0 %v537
        %v539 = vpop.xlane.xlu0 %538
        %v540 = vsub.f32 %v536, %v539
        %v541 = vmul.f32 %v540, 1.442695
        %v542 = vpow.pop %v541
        %v543 = vsel %vm445, %v542, 0.0
        %544 = vadd.xlane.f32.xlu0 %v543
        %v545 = vpop.xlane.xlu0 %544
        %v546 = vrcp.pop %v545
        %v547 = vmul.f32 %v542, %v546
        %549 = vrot.lane.b32.xlu0 %v405, 96
        %v550 = vpop.permute.xlu0 %549
        %v553 = vsel %vm445, %v547, 0
        %555 = vmatpush.msra.mxu0 0.0
        %556 = vmatpush.msra.mxu0 0.0
        %557 = vmatpush.msra.mxu0 0.0
        %558 = vmatpush.msra.mxu0 0.0
        %559 = vmatpush.msra.mxu0 0.0
        %560 = vmatpush.msra.mxu0 0.0
        %561 = vmatpush.msra.mxu0 0.0
        %562 = vmatpush.msra.mxu0 0.0
        %563 = vmatpush.msra.mxu0 0.0
        %564 = vmatpush.msra.mxu0 0.0
        %565 = vmatpush.msra.mxu0 0.0
        %566 = vmatpush.msra.mxu0 0.0
        %567 = vmatpush.msra.mxu0 0.0
        %568 = vmatpush.msra.mxu0 0.0
        %569 = vmatpush.msra.mxu0 0.0
        %570 = vmatpush.msra.mxu0 %v550
        %571 = vmatmul.f32.gmra.mxu0 %v553
        %v572 = vpop.f32.mrf.mxu0
        %v573 = vadd.f32 0.0, %v572
        %574 = vdwg.mxu0
        %v575 = vld [vmem:[#allocation8 + $0x20] sm:$0xff]
        %v576 = vld [vmem:[#allocation8 + $0x28] sm:$0xff]
        %v577 = vld [vmem:[#allocation8 + $0x30] sm:$0xff]
        %v578 = vld [vmem:[#allocation8 + $0x38] sm:$0xff]
        %v580 = vsel %vm417, %v573, 0
        %582 = vmatpush.msra.mxu0 0.0
        %583 = vmatpush.msra.mxu0 0.0
        %584 = vmatpush.msra.mxu0 0.0
        %585 = vmatpush.msra.mxu0 0.0
        %586 = vmatpush.msra.mxu0 0.0
        %587 = vmatpush.msra.mxu0 0.0
        %588 = vmatpush.msra.mxu0 0.0
        %589 = vmatpush.msra.mxu0 0.0
        %590 = vmatpush.msra.mxu0 0.0
        %591 = vmatpush.msra.mxu0 0.0
        %592 = vmatpush.msra.mxu0 0.0
        %593 = vmatpush.msra.mxu0 0.0
        %594 = vmatpush.msra.mxu0 %v578
        %595 = vmatpush.msra.mxu0 %v577
        %596 = vmatpush.msra.mxu0 %v576
        %597 = vmatpush.msra.mxu0 %v575
        %598 = vmatmul.f32.gmra.mxu0 %v580
        %v599 = vpop.f32.mrf.mxu0
        %v600 = vadd.f32 0.0, %v599
        %601 = vdwg.mxu0
        %v602 = vadd.f32 %v507, %v600
        %603 = vrot.lane.b32.xlu0 %v416, 64
        %v604 = vpop.permute.xlu0 %603
        %605 = vrot.lane.b32.xlu0 %v385, 64
        %v606 = vpop.permute.xlu0 %605
        %v607 = vsel %vm417, %v604, 0
        %v609 = vsel %vm417, %v606, 0
        %611 = vmatpush.xpose.msra.mxu0 0.0
        %612 = vmatpush.xpose.msra.mxu0 0.0
        %613 = vmatpush.xpose.msra.mxu0 0.0
        %614 = vmatpush.xpose.msra.mxu0 0.0
        %615 = vmatpush.xpose.msra.mxu0 0.0
        %616 = vmatpush.xpose.msra.mxu0 0.0
        %617 = vmatpush.xpose.msra.mxu0 0.0
        %618 = vmatpush.xpose.msra.mxu0 0.0
        %619 = vmatpush.xpose.msra.mxu0 0.0
        %620 = vmatpush.xpose.msra.mxu0 0.0
        %621 = vmatpush.xpose.msra.mxu0 0.0
        %622 = vmatpush.xpose.msra.mxu0 0.0
        %623 = vmatpush.xpose.msra.mxu0 0.0
        %624 = vmatpush.xpose.msra.mxu0 0.0
        %625 = vmatpush.xpose.msra.mxu0 0.0
        %626 = vmatpush.xpose.msra.mxu0 %v609
        %627 = vmatmul.f32.gmra.mxu0 %v607
        %v628 = vpop.f32.mrf.mxu0
        %v629 = vadd.f32 0.0, %v628
        %630 = vdwg.mxu0
        %v631 = vsel %vm411, %v629, -1e+30
        %v632 = vsel %vm445, %v631, -inf
        %633 = vmax.xlane.f32.xlu0 %v632
        %v634 = vpop.xlane.xlu0 %633
        %v635 = vsub.f32 %v631, %v634
        %v636 = vmul.f32 %v635, 1.442695
        %v637 = vpow.pop %v636
        %v638 = vsel %vm445, %v637, 0.0
        %639 = vadd.xlane.f32.xlu0 %v638
        %v640 = vpop.xlane.xlu0 %639
        %v641 = vrcp.pop %v640
        %v642 = vmul.f32 %v637, %v641
        %643 = vrot.lane.b32.xlu0 %v405, 64
        %v644 = vpop.permute.xlu0 %643
        %v647 = vsel %vm445, %v642, 0
        %649 = vmatpush.msra.mxu0 0.0
        %650 = vmatpush.msra.mxu0 0.0
        %651 = vmatpush.msra.mxu0 0.0
        %652 = vmatpush.msra.mxu0 0.0
        %653 = vmatpush.msra.mxu0 0.0
        %654 = vmatpush.msra.mxu0 0.0
        %655 = vmatpush.msra.mxu0 0.0
        %656 = vmatpush.msra.mxu0 0.0
        %657 = vmatpush.msra.mxu0 0.0
        %658 = vmatpush.msra.mxu0 0.0
        %659 = vmatpush.msra.mxu0 0.0
        %660 = vmatpush.msra.mxu0 0.0
        %661 = vmatpush.msra.mxu0 0.0
        %662 = vmatpush.msra.mxu0 0.0
        %663 = vmatpush.msra.mxu0 0.0
        %664 = vmatpush.msra.mxu0 %v644
        %665 = vmatmul.f32.gmra.mxu0 %v647
        %v666 = vpop.f32.mrf.mxu0
        %v667 = vadd.f32 0.0, %v666
        %668 = vdwg.mxu0
        %v669 = vld [vmem:[#allocation8 + $0x40] sm:$0xff]
        %v670 = vld [vmem:[#allocation8 + $0x48] sm:$0xff]
        %v671 = vld [vmem:[#allocation8 + $0x50] sm:$0xff]
        %v672 = vld [vmem:[#allocation8 + $0x58] sm:$0xff]
        %v674 = vsel %vm417, %v667, 0
        %676 = vmatpush.msra.mxu0 0.0
        %677 = vmatpush.msra.mxu0 0.0
        %678 = vmatpush.msra.mxu0 0.0
        %679 = vmatpush.msra.mxu0 0.0
        %680 = vmatpush.msra.mxu0 0.0
        %681 = vmatpush.msra.mxu0 0.0
        %682 = vmatpush.msra.mxu0 0.0
        %683 = vmatpush.msra.mxu0 0.0
        %684 = vmatpush.msra.mxu0 0.0
        %685 = vmatpush.msra.mxu0 0.0
        %686 = vmatpush.msra.mxu0 0.0
        %687 = vmatpush.msra.mxu0 0.0
        %688 = vmatpush.msra.mxu0 %v672
        %689 = vmatpush.msra.mxu0 %v671
        %690 = vmatpush.msra.mxu0 %v670
        %691 = vmatpush.msra.mxu0 %v669
        %692 = vmatmul.f32.gmra.mxu0 %v674
        %v693 = vpop.f32.mrf.mxu0
        %v694 = vadd.f32 0.0, %v693
        %695 = vdwg.mxu0
        %v696 = vadd.f32 %v602, %v694
        %697 = vrot.lane.b32.xlu0 %v416, 32
        %v698 = vpop.permute.xlu0 %697
        %699 = vrot.lane.b32.xlu0 %v385, 32
        %v700 = vpop.permute.xlu0 %699
        %v701 = vsel %vm417, %v698, 0
        %v703 = vsel %vm417, %v700, 0
        %705 = vmatpush.xpose.msra.mxu0 0.0
        %706 = vmatpush.xpose.msra.mxu0 0.0
        %707 = vmatpush.xpose.msra.mxu0 0.0
        %708 = vmatpush.xpose.msra.mxu0 0.0
        %709 = vmatpush.xpose.msra.mxu0 0.0
        %710 = vmatpush.xpose.msra.mxu0 0.0
        %711 = vmatpush.xpose.msra.mxu0 0.0
        %712 = vmatpush.xpose.msra.mxu0 0.0
        %713 = vmatpush.xpose.msra.mxu0 0.0
        %714 = vmatpush.xpose.msra.mxu0 0.0
        %715 = vmatpush.xpose.msra.mxu0 0.0
        %716 = vmatpush.xpose.msra.mxu0 0.0
        %717 = vmatpush.xpose.msra.mxu0 0.0
        %718 = vmatpush.xpose.msra.mxu0 0.0
        %719 = vmatpush.xpose.msra.mxu0 0.0
        %720 = vmatpush.xpose.msra.mxu0 %v703
        %721 = vmatmul.f32.gmra.mxu0 %v701
        %v722 = vpop.f32.mrf.mxu0
        %v723 = vadd.f32 0.0, %v722
        %724 = vdwg.mxu0
        %v725 = vsel %vm411, %v723, -1e+30
        %v726 = vsel %vm445, %v725, -inf
        %727 = vmax.xlane.f32.xlu0 %v726
        %v728 = vpop.xlane.xlu0 %727
        %v729 = vsub.f32 %v725, %v728
        %v730 = vmul.f32 %v729, 1.442695
        %v731 = vpow.pop %v730
        %v732 = vsel %vm445, %v731, 0.0
        %733 = vadd.xlane.f32.xlu0 %v732
        %v734 = vpop.xlane.xlu0 %733
        %v735 = vrcp.pop %v734
        %v736 = vmul.f32 %v731, %v735
        %737 = vrot.lane.b32.xlu0 %v405, 32
        %v738 = vpop.permute.xlu0 %737
        %v741 = vsel %vm445, %v736, 0
        %743 = vmatpush.msra.mxu0 0.0
        %744 = vmatpush.msra.mxu0 0.0
        %745 = vmatpush.msra.mxu0 0.0
        %746 = vmatpush.msra.mxu0 0.0
        %747 = vmatpush.msra.mxu0 0.0
        %748 = vmatpush.msra.mxu0 0.0
        %749 = vmatpush.msra.mxu0 0.0
        %750 = vmatpush.msra.mxu0 0.0
        %751 = vmatpush.msra.mxu0 0.0
        %752 = vmatpush.msra.mxu0 0.0
        %753 = vmatpush.msra.mxu0 0.0
        %754 = vmatpush.msra.mxu0 0.0
        %755 = vmatpush.msra.mxu0 0.0
        %756 = vmatpush.msra.mxu0 0.0
        %757 = vmatpush.msra.mxu0 0.0
        %758 = vmatpush.msra.mxu0 %v738
        %759 = vmatmul.f32.gmra.mxu0 %v741
        %v760 = vpop.f32.mrf.mxu0
        %v761 = vadd.f32 0.0, %v760
        %762 = vdwg.mxu0
        %v763 = vld [vmem:[#allocation8 + $0x60] sm:$0xff]
        %v764 = vld [vmem:[#allocation8 + $0x68] sm:$0xff]
        %v765 = vld [vmem:[#allocation8 + $0x70] sm:$0xff]
        %v766 = vld [vmem:[#allocation8 + $0x78] sm:$0xff]
        %v768 = vsel %vm417, %v761, 0
        %770 = vmatpush.msra.mxu0 0.0
        %771 = vmatpush.msra.mxu0 0.0
        %772 = vmatpush.msra.mxu0 0.0
        %773 = vmatpush.msra.mxu0 0.0
        %774 = vmatpush.msra.mxu0 0.0
        %775 = vmatpush.msra.mxu0 0.0
        %776 = vmatpush.msra.mxu0 0.0
        %777 = vmatpush.msra.mxu0 0.0
        %778 = vmatpush.msra.mxu0 0.0
        %779 = vmatpush.msra.mxu0 0.0
        %780 = vmatpush.msra.mxu0 0.0
        %781 = vmatpush.msra.mxu0 0.0
        %782 = vmatpush.msra.mxu0 %v766
        %783 = vmatpush.msra.mxu0 %v765
        %784 = vmatpush.msra.mxu0 %v764
        %785 = vmatpush.msra.mxu0 %v763
        %786 = vmatmul.f32.gmra.mxu0 %v768
        %v787 = vpop.f32.mrf.mxu0
        %v788 = vadd.f32 0.0, %v787
        %789 = vdwg.mxu0
        %v790 = vadd.f32 %v696, %v788
        %791 = vst [vmem:[%s289] sm:$0xff] %v790
        %s792 = sand.u32 %s142, 1
        %s793 = scalar_lea.sflag [#allocation4], %s792
        %s794 = sand.u32 %s142, 1
        %s795 = smul.addr %s794, 8
        %s796 = scalar_lea.vmem [#allocation10], %s795
        // Predicated region
        $region57: #{tpu_custom_call.1} parent=39 // pred_check
          %p797 = pneg %p152
        $region58: #{tpu_custom_call.1} parent=39 // pred_check_branch
          %799 = sbr.rel (%p797) target = $region60
        $region59: #{tpu_custom_call.1} parent=39 // pred_region
          %801 = vsyncadd %s793, 0
          %s802 = smul.addr %s24, 8
          %s803 = scalar_lea.hbm %s5, %s802
          %s805 = sshll.u32 %s796, 4
          %s806 = int_to_ptr.vmem [resolvable:$true] %s805
          %s807 = sshll.u32 %s803, 4
          %s808 = int_to_ptr.hbm [resolvable:$true] %s807
          %810 = dma.vmem_to_hbm [thread:$0]  %s806, 128, %s808, %s793
        $region60: #{tpu_custom_call.1} parent=39 // pred_fallthru
          _
      $region40: #{tpu_custom_call.1} parent=5 // pred_fallthru
        _
      %p811 = scmp.le.s32.totalorder 2, %s19
      // Predicated region
      $region61: #{tpu_custom_call.1} parent=5 // pred_check
        %p812 = pneg %p811
      $region62: #{tpu_custom_call.1} parent=5 // pred_check_branch
        %814 = sbr.rel (%p812) target = $region64
      $region63: #{tpu_custom_call.1} parent=5 // pred_region
        %s815 = ssub.s32 %s19, 2
        // Predicated region
        $region65: #{tpu_custom_call.1} parent=63 // pred_check
          %p816 = pneg %p158
        $region66: #{tpu_custom_call.1} parent=63 // pred_check_branch
          %818 = sbr.rel (%p816) target = $region68
        $region67: #{tpu_custom_call.1} parent=63 // pred_region
          %s819 = sand.u32 %s143, 1
          %s820 = scalar_lea.sflag [#allocation4], %s819
          %s821 = sand.u32 %s143, 1
          %s822 = smul.addr %s821, 8
          %s823 = scalar_lea.vmem [#allocation10], %s822
          %825 = dma.done %s820, 128
        $region68: #{tpu_custom_call.1} parent=63 // pred_fallthru
          _
      $region64: #{tpu_custom_call.1} parent=5 // pred_fallthru
        _
    $region6: #{tpu_custom_call.1} parent=1 // loop_footer
      %s23 = sadd.s32 1, %s19
    $region7: #{tpu_custom_call.1} parent=1 // loop_footer_branch
      %18 = sbr.rel target = $region3
    $region8: #{tpu_custom_call.1} parent=1 // loop_exit
      _
    %826 = vsyncpa [#allocation3], 1
    %s827 = scalar_lea.sflag [#allocation3], 1
    %828 = vsyncpa %s827, 1
    %829 = vsyncpa [#allocation6], 1
    %830 = vsyncpa [#allocation9], 1
    %831 = vsyncpa [#allocation4], 1
    %s832 = scalar_lea.sflag [#allocation4], 1
    %833 = vsyncpa %s832, 1

</llo_original>
